<compile_context>
chip_gen: v7x
topology: tpu7x:2x2x1
jax: 0.10.0
libtpu: 0.0.40
codegen_flags: <defaults>
</compile_context>

<pallas_src>
import functools

import numpy as np
import jax
import jax.numpy as jnp
from jax.experimental import pallas as pl
from jax.experimental.pallas import tpu as pltpu

CODEBOOK_MEANS = [0.58, -0.11, -0.18, -0.04, -0.23, -0.06, 0.08, 0, 0.03]
CODEBOOK_STDS = [4.95, 4.0, 3.61, 3.41, 3.24, 3.16, 3.06, 2.93, 2.79]
DIM_SINGLE = 8

LATENT_DIM = len(CODEBOOK_MEANS) * DIM_SINGLE      # 72
NUM_TIMESTEPS = 1000

MAX_LANE_TILE = 1024   # lanes per DMA tile (perf review: 512-2048; 1024 default)
SUB_LANES = 128        # lanes per in-kernel compute chunk (bounds vreg live ranges)


def _ddpm_alphas_cumprod(num_timesteps=NUM_TIMESTEPS, beta_start=1e-4, beta_end=2e-2):
    # diffusers DDPMScheduler default: linear beta schedule
    betas = jnp.linspace(beta_start, beta_end, num_timesteps, dtype=jnp.float32)
    return jnp.cumprod(1.0 - betas)


def _choose_tiles(L):
    """DMA lane-tile TL and in-kernel compute chunk SUB for a signal length L."""
    if L < 128:
        return L, L                               # full-dim block (lane width == L)
    tl = min(MAX_LANE_TILE, (L // 128) * 128)     # multiple of 128, capped at 1024
    return tl, SUB_LANES


def _ddpm_loss_kernel(scal_ref, lat_ref, noi_ref, emb_ref, norm_ref, w_ref,
                      out_ref, *, L, TL, SUB):
    """One (batch, lane-tile) grid step of the fused DDPM training-loss path.

    scal_ref : (3, B)    f32  SMEM  row0=sqrt(acp[t_b]), row1=sqrt(1-acp[t_b]),
                                    row2=p2_weight[t_b]/(B*C*L)
    lat_ref  : (C, TL)   f32  VMEM  raw latent tile (batch dim squeezed)
    noi_ref  : (C, TL)   f32  VMEM  noise tile
    emb_ref  : (C, 1)    f32  VMEM  per-timestep embedding of this batch element
    norm_ref : (C, 2)    f32  VMEM  col0 = 1/std, col1 = -mean/std
    w_ref    : (C, C)    bf16 VMEM  synthetic 1x1-conv denoiser weight
    out_ref  : (8, SUB)  f32  VMEM  lane-dense partial sums of the weighted L1
    """
    b = pl.program_id(0)
    i = pl.program_id(1)
    C = lat_ref.shape[0]
    n_sub = TL // SUB
    ragged = (L % TL) != 0               # static: last lane-tile is partial

    # Per-batch scalars from SMEM: free scalar broadcasts (no (1,TL)->(C,TL)
    # sublane-broadcast work, no rows slab in HBM).
    sa = scal_ref[0, b]                  # sqrt(alphas_cumprod[t_b])
    so = scal_ref[1, b]                  # sqrt(1 - alphas_cumprod[t_b])
    wfac = scal_ref[2, b]                # p2_weight[t_b] / (B*C*L)

    norm = norm_ref[...]
    inv_std = norm[:, 0:1]               # (C, 1)
    bias = norm[:, 1:2]                  # (C, 1) = -mean/std
    w = w_ref[...]                       # (C, C) bf16, resident across chunks

    # Hoist the lane broadcast of the time embedding out of the chunk loop
    # (JAX does not CSE broadcast_in_dim).
    emb = jnp.broadcast_to(emb_ref[...], (C, SUB))

    acc = jnp.zeros((8, SUB), jnp.float32)
    # Process the TL-lane tile in SUB-lane chunks: every temporary is (C, SUB)
    # f32 = 9 vregs, so the register file is never blown at large TL. Slices
    # are static -> zero-cost ref views / aligned vreg loads.
    for s in range(n_sub):
        lo = s * SUB
        lat = lat_ref[:, lo:lo + SUB]                      # (C, SUB)
        noi = noi_ref[:, lo:lo + SUB]                      # (C, SUB)

        # dac_latent_normalize_heterogeneous, fused into a single FMA
        xn = lat * inv_std + bias
        # q_sample / DDPMScheduler.add_noise
        x_noisy = sa * xn + so * noi
        # synthetic denoise model: 1x1 conv over channels (bf16 MXU, f32 acc)
        model_out = jnp.dot(w, x_noisy.astype(jnp.bfloat16),
                            preferred_element_type=jnp.float32) + emb
        # v-prediction target: get_velocity = sqrt_acp*noise - sqrt_1macp*sample
        target = sa * noi - so * xn

        diff = jnp.abs(model_out - target)
        if ragged:
            # Mask lanes past the true signal length (jnp.where, not multiply,
            # so stale-VMEM garbage / NaNs in the padded region cannot leak).
            lane = jax.lax.broadcasted_iota(jnp.int32, (1, SUB), 1)
            diff = jnp.where(i * TL + lo + lane < L, diff, 0.0)

        wdiff = diff * wfac                                # p2 / mean weighting
        # Channel-group reduce (C=72 -> 8 sublanes): 8 VPU adds of vreg rows.
        part = wdiff[0:8, :]
        for g in range(1, C // 8):
            part = part + wdiff[g * 8:(g + 1) * 8, :]
        acc = acc + part

    out_ref[...] = acc


def dac_latent_ddpm_forward(latent, t, noise, params):
    """Fused DACLatentDDPM.forward training loss. Returns a scalar f32 loss."""
    B, C, L = latent.shape
    assert C == LATENT_DIM, f"dim of signal must be {LATENT_DIM}"

    TL, SUB = _choose_tiles(L)
    n_lane_tiles = pl.cdiv(L, TL)

    acp = _ddpm_alphas_cumprod()
    sa_b = jnp.sqrt(acp)[t].astype(jnp.float32)              # (B,)
    so_b = jnp.sqrt(1.0 - acp)[t].astype(jnp.float32)        # (B,)
    p2_b = params["p2_loss_weight"][t].astype(jnp.float32)   # (B,)
    # Tiny per-batch scalar table -> SMEM (replaces the old (8, B*L) rows slab).
    scal = jnp.stack([sa_b, so_b, p2_b / (B * C * L)], axis=0)        # (3, B)

    # Per-timestep embedding, one (C, 1) column per batch element (replaces the
    # fully materialized (C, B*L) emb2d slab).
    emb = params["time_emb"][t].astype(jnp.float32)[:, :, None]       # (B, C, 1)

    # Normalization constants fused into FMA form: xn = lat*inv_std + bias.
    mean = jnp.repeat(jnp.asarray(CODEBOOK_MEANS, jnp.float32), DIM_SINGLE)
    std = jnp.repeat(jnp.asarray(CODEBOOK_STDS, jnp.float32), DIM_SINGLE)
    inv_std = 1.0 / std
    norm = jnp.stack([inv_std, -mean * inv_std], axis=1)              # (C, 2)

    w_bf16 = params["w"].astype(jnp.bfloat16)     # halve the resident MXU weight

    # TODO(synk): latent/noise could be shipped as bf16 to halve the two dominant
    # DMA streams (review item 5); kept f32 here to preserve reference numerics.
    lat_f32 = latent.astype(jnp.float32)
    noi_f32 = noise.astype(jnp.float32)

    kernel = functools.partial(_ddpm_loss_kernel, L=L, TL=TL, SUB=SUB)

    partials = pl.pallas_call(
        kernel,
        grid=(B, n_lane_tiles),
        in_specs=[
            pl.BlockSpec(memory_space=pltpu.MemorySpace.SMEM),        # scalars
            pl.BlockSpec((None, C, TL), lambda b, i: (b, 0, i)),      # latent
            pl.BlockSpec((None, C, TL), lambda b, i: (b, 0, i)),      # noise
            pl.BlockSpec((None, C, 1), lambda b, i: (b, 0, 0)),       # time emb
            pl.BlockSpec((C, 2), lambda b, i: (0, 0)),                # norm const
            pl.BlockSpec((C, C), lambda b, i: (0, 0)),                # weight
        ],
        out_specs=pl.BlockSpec((None, 8, SUB), lambda b, i: (b, 0, i)),
        out_shape=jax.ShapeDtypeStruct((B, 8, n_lane_tiles * SUB), jnp.float32),
        compiler_params=pltpu.CompilerParams(
            dimension_semantics=("parallel", "parallel")),
    )(scal, lat_f32, noi_f32, emb, norm, w_bf16)

    # Cheap final reduce of the per-tile lane-dense partial sums.
    return jnp.sum(partials)


def reference_forward(latent, t, noise, params):
    """Pure-JAX reference mirroring the PyTorch forward semantics."""
    B, C, L = latent.shape
    mean = jnp.repeat(jnp.asarray(CODEBOOK_MEANS, jnp.float32), DIM_SINGLE)
    std = jnp.repeat(jnp.asarray(CODEBOOK_STDS, jnp.float32), DIM_SINGLE)
    xn = (latent - mean[None, :, None]) / std[None, :, None]

    acp = _ddpm_alphas_cumprod()
    sa = jnp.sqrt(acp)[t][:, None, None]
    so = jnp.sqrt(1.0 - acp)[t][:, None, None]
    x = sa * xn + so * noise

    emb = params["time_emb"][t][:, :, None]
    out = jnp.einsum("ij,bjl->bil", params["w"], x,
                     precision=jax.lax.Precision.HIGHEST) + emb
    target = sa * noise - so * xn

    per_batch = jnp.abs(out - target).reshape(B, -1).mean(axis=1)
    return jnp.mean(per_batch * params["p2_loss_weight"][t])


if __name__ == "__main__":
    key = jax.random.PRNGKey(0)
    kw, ke = jax.random.split(key, 2)

    B, C = 2, LATENT_DIM
    params = {
        # TODO(synk): real denoise_model is external; synthetic 1x1-conv
        # (72 -> 72 channel matmul) + per-timestep embedding stands in for it.
        "w": jax.random.normal(kw, (C, C), jnp.float32) * 0.15,
        "time_emb": jax.random.normal(ke, (NUM_TIMESTEPS, C), jnp.float32) * 0.1,
        # TODO(synk): p2_loss_weight schedule is not defined in the provided
        # spec __init__; the standard default (gamma=0) is all-ones.
        "p2_loss_weight": jnp.ones((NUM_TIMESTEPS,), jnp.float32),
    }

    # Two small configs: L=256 exercises the multi-chunk path (TL=256, 2 chunks),
    # L=192 exercises the multi-tile grid with a ragged, masked last tile.
    for L in (256, 192):
        kl, kn, kt = jax.random.split(jax.random.fold_in(key, L), 3)
        latent = jax.random.normal(kl, (B, C, L), jnp.float32) * 3.0
        noise = jax.random.normal(kn, (B, C, L), jnp.float32)
        # forward() samples t ~ randint(0, num_timesteps, (b,)) — done in JAX.
        t = jax.random.randint(kt, (B,), 0, NUM_TIMESTEPS)

        loss = dac_latent_ddpm_forward(latent, t, noise, params)
        jax.block_until_ready(loss)
        ref = reference_forward(latent, t, noise, params)
        assert np.allclose(np.asarray(loss), np.asarray(ref),
                           rtol=1e-2, atol=1e-3), (L, loss, ref)

    print("KERNEL_OK")
</pallas_src>

<mosaic_0001>
module attributes {stable_mosaic.version = 11 : i64} {
  func.func @_ddpm_loss_kernel(%arg0: i32, %arg1: i32, %arg2: memref<3x2xf32, #tpu.memory_space<smem>>, %arg3: memref<1x72x256xf32, #tpu.memory_space<vmem>>, %arg4: memref<1x72x256xf32, #tpu.memory_space<vmem>>, %arg5: memref<1x72x1xf32, #tpu.memory_space<vmem>>, %arg6: memref<72x2xf32, #tpu.memory_space<vmem>>, %arg7: memref<72x72xbf16, #tpu.memory_space<vmem>>, %arg8: memref<1x8x128xf32, #tpu.memory_space<vmem>>) attributes {dimension_semantics = [#tpu.dimension_semantics<parallel>, #tpu.dimension_semantics<parallel>], iteration_bounds = array<i64: 2, 1>, scalar_prefetch = 0 : i64, scratch_operands = 0 : i64, tpu.core_type = #tpu.core_type<tc>, window_params = [{transform_indices = @transform_0, window_bounds = array<i64: 3, 2>}, {transform_indices = @transform_1, window_bounds = array<i64: 1, 72, 256>}, {transform_indices = @transform_2, window_bounds = array<i64: 1, 72, 256>}, {transform_indices = @transform_3, window_bounds = array<i64: 1, 72, 1>}, {pipeline_mode = #tpu.pipeline_mode<synchronous>, transform_indices = @transform_4, window_bounds = array<i64: 72, 2>}, {pipeline_mode = #tpu.pipeline_mode<synchronous>, transform_indices = @transform_5, window_bounds = array<i64: 72, 72>}, {transform_indices = @transform_6, window_bounds = array<i64: 1, 8, 128>}]} {
    %c0 = arith.constant 0 : index
    %0 = arith.index_cast %arg0 : i32 to index
    %1 = memref.load %arg2[%c0, %0] : memref<3x2xf32, #tpu.memory_space<smem>>
    %c1 = arith.constant 1 : index
    %2 = arith.index_cast %arg0 : i32 to index
    %3 = memref.load %arg2[%c1, %2] : memref<3x2xf32, #tpu.memory_space<smem>>
    %c2 = arith.constant 2 : index
    %4 = arith.index_cast %arg0 : i32 to index
    %5 = memref.load %arg2[%c2, %4] : memref<3x2xf32, #tpu.memory_space<smem>>
    %c0_0 = arith.constant 0 : index
    %c0_1 = arith.constant 0 : index
    %6 = vector.load %arg6[%c0_0, %c0_1] : memref<72x2xf32, #tpu.memory_space<vmem>>, vector<72x2xf32>
    %7 = vector.extract_strided_slice %6 {offsets = [0, 0], sizes = [72, 1], strides = [1, 1]} : vector<72x2xf32> to vector<72x1xf32>
    %8 = vector.extract_strided_slice %6 {offsets = [0, 1], sizes = [72, 1], strides = [1, 1]} : vector<72x2xf32> to vector<72x1xf32>
    %c0_2 = arith.constant 0 : index
    %c0_3 = arith.constant 0 : index
    %9 = vector.load %arg7[%c0_2, %c0_3] : memref<72x72xbf16, #tpu.memory_space<vmem>>, vector<72x72xbf16>
    %c0_4 = arith.constant 0 : index
    %c0_5 = arith.constant 0 : index
    %c0_6 = arith.constant 0 : index
    %10 = vector.load %arg5[%c0_4, %c0_5, %c0_6] : memref<1x72x1xf32, #tpu.memory_space<vmem>>, vector<1x72x1xf32>
    %11 = vector.shape_cast %10 : vector<1x72x1xf32> to vector<72x1xf32>
    %12 = vector.shape_cast %11 : vector<72x1xf32> to vector<72x1xf32>
    %13 = vector.broadcast %12 : vector<72x1xf32> to vector<72x128xf32>
    %cst = arith.constant 0.000000e+00 : f32
    %14 = vector.broadcast %cst : f32 to vector<8x128xf32>
    %c0_7 = arith.constant 0 : index
    %c0_8 = arith.constant 0 : index
    %c0_9 = arith.constant 0 : index
    %15 = vector.load %arg3[%c0_7, %c0_8, %c0_9] : memref<1x72x256xf32, #tpu.memory_space<vmem>>, vector<1x72x128xf32>
    %16 = vector.shape_cast %15 : vector<1x72x128xf32> to vector<72x128xf32>
    %c0_10 = arith.constant 0 : index
    %c0_11 = arith.constant 0 : index
    %c0_12 = arith.constant 0 : index
    %17 = vector.load %arg4[%c0_10, %c0_11, %c0_12] : memref<1x72x256xf32, #tpu.memory_space<vmem>>, vector<1x72x128xf32>
    %18 = vector.shape_cast %17 : vector<1x72x128xf32> to vector<72x128xf32>
    %19 = vector.broadcast %7 : vector<72x1xf32> to vector<72x128xf32>
    %20 = arith.mulf %16, %19 : vector<72x128xf32>
    %21 = vector.broadcast %8 : vector<72x1xf32> to vector<72x128xf32>
    %22 = arith.addf %20, %21 : vector<72x128xf32>
    %23 = vector.broadcast %1 : f32 to vector<72x128xf32>
    %24 = arith.mulf %23, %22 : vector<72x128xf32>
    %25 = vector.broadcast %3 : f32 to vector<72x128xf32>
    %26 = arith.mulf %25, %18 : vector<72x128xf32>
    %27 = arith.addf %24, %26 : vector<72x128xf32>
    %28 = arith.truncf %27 : vector<72x128xf32> to vector<72x128xbf16>
    %cst_13 = arith.constant dense<0.000000e+00> : vector<72x128xf32>
    %29 = tpu.matmul %9, %28, %cst_13 {dimension_numbers = #tpu.dot_dimension_numbers<[1], [0], [0], [1], [0, 0, 1, 1], [], []>} : vector<72x72xbf16>, vector<72x128xbf16>, vector<72x128xf32> -> vector<72x128xf32>
    %30 = arith.addf %29, %13 : vector<72x128xf32>
    %31 = vector.broadcast %1 : f32 to vector<72x128xf32>
    %32 = arith.mulf %31, %18 : vector<72x128xf32>
    %33 = vector.broadcast %3 : f32 to vector<72x128xf32>
    %34 = arith.mulf %33, %22 : vector<72x128xf32>
    %35 = arith.subf %32, %34 : vector<72x128xf32>
    %36 = arith.subf %30, %35 : vector<72x128xf32>
    %37 = math.absf %36 : vector<72x128xf32>
    %38 = vector.broadcast %5 : f32 to vector<72x128xf32>
    %39 = arith.mulf %37, %38 : vector<72x128xf32>
    %40 = vector.extract_strided_slice %39 {offsets = [0, 0], sizes = [8, 128], strides = [1, 1]} : vector<72x128xf32> to vector<8x128xf32>
    %41 = vector.extract_strided_slice %39 {offsets = [8, 0], sizes = [8, 128], strides = [1, 1]} : vector<72x128xf32> to vector<8x128xf32>
    %42 = arith.addf %40, %41 : vector<8x128xf32>
    %43 = vector.extract_strided_slice %39 {offsets = [16, 0], sizes = [8, 128], strides = [1, 1]} : vector<72x128xf32> to vector<8x128xf32>
    %44 = arith.addf %42, %43 : vector<8x128xf32>
    %45 = vector.extract_strided_slice %39 {offsets = [24, 0], sizes = [8, 128], strides = [1, 1]} : vector<72x128xf32> to vector<8x128xf32>
    %46 = arith.addf %44, %45 : vector<8x128xf32>
    %47 = vector.extract_strided_slice %39 {offsets = [32, 0], sizes = [8, 128], strides = [1, 1]} : vector<72x128xf32> to vector<8x128xf32>
    %48 = arith.addf %46, %47 : vector<8x128xf32>
    %49 = vector.extract_strided_slice %39 {offsets = [40, 0], sizes = [8, 128], strides = [1, 1]} : vector<72x128xf32> to vector<8x128xf32>
    %50 = arith.addf %48, %49 : vector<8x128xf32>
    %51 = vector.extract_strided_slice %39 {offsets = [48, 0], sizes = [8, 128], strides = [1, 1]} : vector<72x128xf32> to vector<8x128xf32>
    %52 = arith.addf %50, %51 : vector<8x128xf32>
    %53 = vector.extract_strided_slice %39 {offsets = [56, 0], sizes = [8, 128], strides = [1, 1]} : vector<72x128xf32> to vector<8x128xf32>
    %54 = arith.addf %52, %53 : vector<8x128xf32>
    %55 = vector.extract_strided_slice %39 {offsets = [64, 0], sizes = [8, 128], strides = [1, 1]} : vector<72x128xf32> to vector<8x128xf32>
    %56 = arith.addf %54, %55 : vector<8x128xf32>
    %57 = arith.addf %14, %56 : vector<8x128xf32>
    %c0_14 = arith.constant 0 : index
    %c0_15 = arith.constant 0 : index
    %c128 = arith.constant 128 : index
    %58 = vector.load %arg3[%c0_14, %c0_15, %c128] : memref<1x72x256xf32, #tpu.memory_space<vmem>>, vector<1x72x128xf32>
    %59 = vector.shape_cast %58 : vector<1x72x128xf32> to vector<72x128xf32>
    %c0_16 = arith.constant 0 : index
    %c0_17 = arith.constant 0 : index
    %c128_18 = arith.constant 128 : index
    %60 = vector.load %arg4[%c0_16, %c0_17, %c128_18] : memref<1x72x256xf32, #tpu.memory_space<vmem>>, vector<1x72x128xf32>
    %61 = vector.shape_cast %60 : vector<1x72x128xf32> to vector<72x128xf32>
    %62 = vector.broadcast %7 : vector<72x1xf32> to vector<72x128xf32>
    %63 = arith.mulf %59, %62 : vector<72x128xf32>
    %64 = vector.broadcast %8 : vector<72x1xf32> to vector<72x128xf32>
    %65 = arith.addf %63, %64 : vector<72x128xf32>
    %66 = vector.broadcast %1 : f32 to vector<72x128xf32>
    %67 = arith.mulf %66, %65 : vector<72x128xf32>
    %68 = vector.broadcast %3 : f32 to vector<72x128xf32>
    %69 = arith.mulf %68, %61 : vector<72x128xf32>
    %70 = arith.addf %67, %69 : vector<72x128xf32>
    %71 = arith.truncf %70 : vector<72x128xf32> to vector<72x128xbf16>
    %cst_19 = arith.constant dense<0.000000e+00> : vector<72x128xf32>
    %72 = tpu.matmul %9, %71, %cst_19 {dimension_numbers = #tpu.dot_dimension_numbers<[1], [0], [0], [1], [0, 0, 1, 1], [], []>} : vector<72x72xbf16>, vector<72x128xbf16>, vector<72x128xf32> -> vector<72x128xf32>
    %73 = arith.addf %72, %13 : vector<72x128xf32>
    %74 = vector.broadcast %1 : f32 to vector<72x128xf32>
    %75 = arith.mulf %74, %61 : vector<72x128xf32>
    %76 = vector.broadcast %3 : f32 to vector<72x128xf32>
    %77 = arith.mulf %76, %65 : vector<72x128xf32>
    %78 = arith.subf %75, %77 : vector<72x128xf32>
    %79 = arith.subf %73, %78 : vector<72x128xf32>
    %80 = math.absf %79 : vector<72x128xf32>
    %81 = vector.broadcast %5 : f32 to vector<72x128xf32>
    %82 = arith.mulf %80, %81 : vector<72x128xf32>
    %83 = vector.extract_strided_slice %82 {offsets = [0, 0], sizes = [8, 128], strides = [1, 1]} : vector<72x128xf32> to vector<8x128xf32>
    %84 = vector.extract_strided_slice %82 {offsets = [8, 0], sizes = [8, 128], strides = [1, 1]} : vector<72x128xf32> to vector<8x128xf32>
    %85 = arith.addf %83, %84 : vector<8x128xf32>
    %86 = vector.extract_strided_slice %82 {offsets = [16, 0], sizes = [8, 128], strides = [1, 1]} : vector<72x128xf32> to vector<8x128xf32>
    %87 = arith.addf %85, %86 : vector<8x128xf32>
    %88 = vector.extract_strided_slice %82 {offsets = [24, 0], sizes = [8, 128], strides = [1, 1]} : vector<72x128xf32> to vector<8x128xf32>
    %89 = arith.addf %87, %88 : vector<8x128xf32>
    %90 = vector.extract_strided_slice %82 {offsets = [32, 0], sizes = [8, 128], strides = [1, 1]} : vector<72x128xf32> to vector<8x128xf32>
    %91 = arith.addf %89, %90 : vector<8x128xf32>
    %92 = vector.extract_strided_slice %82 {offsets = [40, 0], sizes = [8, 128], strides = [1, 1]} : vector<72x128xf32> to vector<8x128xf32>
    %93 = arith.addf %91, %92 : vector<8x128xf32>
    %94 = vector.extract_strided_slice %82 {offsets = [48, 0], sizes = [8, 128], strides = [1, 1]} : vector<72x128xf32> to vector<8x128xf32>
    %95 = arith.addf %93, %94 : vector<8x128xf32>
    %96 = vector.extract_strided_slice %82 {offsets = [56, 0], sizes = [8, 128], strides = [1, 1]} : vector<72x128xf32> to vector<8x128xf32>
    %97 = arith.addf %95, %96 : vector<8x128xf32>
    %98 = vector.extract_strided_slice %82 {offsets = [64, 0], sizes = [8, 128], strides = [1, 1]} : vector<72x128xf32> to vector<8x128xf32>
    %99 = arith.addf %97, %98 : vector<8x128xf32>
    %100 = arith.addf %57, %99 : vector<8x128xf32>
    %c0_20 = arith.constant 0 : index
    %c0_21 = arith.constant 0 : index
    %c0_22 = arith.constant 0 : index
    %101 = vector.load %arg8[%c0_20, %c0_21, %c0_22] : memref<1x8x128xf32, #tpu.memory_space<vmem>>, vector<1x8x128xf32>
    %102 = vector.shape_cast %101 : vector<1x8x128xf32> to vector<8x128xf32>
    %103 = vector.shape_cast %100 : vector<8x128xf32> to vector<1x8x128xf32>
    tpu.vector_store %arg8[%c0_20, %c0_21, %c0_22], %103 {strides = array<i32>} : memref<1x8x128xf32, #tpu.memory_space<vmem>>, vector<1x8x128xf32>,
    return
  }
  func.func @transform_0(%arg0: i32, %arg1: i32) -> (i32, i32) {
    %c0_i32 = arith.constant 0 : i32
    %c0_i32_0 = arith.constant 0 : i32
    %c0_i32_1 = arith.constant 0 : i32
    return %c0_i32, %c0_i32_0 : i32, i32
  }
  func.func @transform_1(%arg0: i32, %arg1: i32) -> (i32, i32, i32) {
    %c0_i32 = arith.constant 0 : i32
    %c0_i32_0 = arith.constant 0 : i32
    return %arg0, %c0_i32, %arg1 : i32, i32, i32
  }
  func.func @transform_2(%arg0: i32, %arg1: i32) -> (i32, i32, i32) {
    %c0_i32 = arith.constant 0 : i32
    %c0_i32_0 = arith.constant 0 : i32
    return %arg0, %c0_i32, %arg1 : i32, i32, i32
  }
  func.func @transform_3(%arg0: i32, %arg1: i32) -> (i32, i32, i32) {
    %c0_i32 = arith.constant 0 : i32
    %c0_i32_0 = arith.constant 0 : i32
    %c0_i32_1 = arith.constant 0 : i32
    return %arg0, %c0_i32, %c0_i32_0 : i32, i32, i32
  }
  func.func @transform_4(%arg0: i32, %arg1: i32) -> (i32, i32) {
    %c0_i32 = arith.constant 0 : i32
    %c0_i32_0 = arith.constant 0 : i32
    %c0_i32_1 = arith.constant 0 : i32
    return %c0_i32, %c0_i32_0 : i32, i32
  }
  func.func @transform_5(%arg0: i32, %arg1: i32) -> (i32, i32) {
    %c0_i32 = arith.constant 0 : i32
    %c0_i32_0 = arith.constant 0 : i32
    %c0_i32_1 = arith.constant 0 : i32
    return %c0_i32, %c0_i32_0 : i32, i32
  }
  func.func @transform_6(%arg0: i32, %arg1: i32) -> (i32, i32, i32) {
    %c0_i32 = arith.constant 0 : i32
    %c0_i32_0 = arith.constant 0 : i32
    return %arg0, %c0_i32, %arg1 : i32, i32, i32
  }
}

</mosaic_0001>

<llo_original>
// kernel: tpu_custom_call.1
$region0: #{tpu_custom_call.1}
  #allocation0 [shape = 'u32[]', space=smem, size = 0x4, offset = 0x4, fixed_abs, tag = 'smem constant byte address 0x4 - core index']
  #allocation1 [shape = 'u32[144,128]{1,0:T(1,128)}', space=vmem, size = 0x12000, scoped, tag = 'internal scratch']
  %s0 = inlined_call_operand.vmem [shape: f32[3,2], index: 0, kind: input, shape index: {}]
  %s1 = inlined_call_operand.hbm [shape: f32[2,72,256], index: 1, kind: input, shape index: {}]
  %s2 = inlined_call_operand.hbm [shape: f32[2,72,256], index: 2, kind: input, shape index: {}]
  %s3 = inlined_call_operand.vmem [shape: f32[2,72,1], index: 3, kind: input, shape index: {}]
  %s4 = inlined_call_operand.vmem [shape: f32[72,2], index: 4, kind: input, shape index: {}]
  %s5 = inlined_call_operand.vmem [shape: bf16[72,72], index: 5, kind: input, shape index: {}]
  %s6 = inlined_call_operand.hbm [shape: f32[2,8,128], index: 6, kind: output, shape index: {}]
  %s7 = sld [smem:[#allocation0]]
  $region69: #{tpu_custom_call.1} parent=0
    _
  %s9 = ssub.s32 1, %s7
  %s10 = scalar_select 0, %s9, %s7
  $region1: #{tpu_custom_call.1} parent=0
    #allocation2 [shape = 'u8[2048]{0}', space=smem, size = 0x800, scoped, tag = 'input window, operand 0, single buffered']
    #allocation3 [shape = 's32[2]{0}', space=sflag, size = 0x8, scoped, tag = 'scoped memory for tpu_custom_call.1']
    #allocation4 [shape = 's32[2]{0}', space=sflag, size = 0x8, scoped, tag = 'scoped memory for tpu_custom_call.1']
    #allocation5 [shape = 's32[2]{0}', space=sflag, size = 0x8, scoped, tag = 'scoped memory for tpu_custom_call.1']
    #allocation6 [shape = 'u8[147456]{0}', space=vmem, size = 0x24000, scoped, tag = 'input window, operand 1']
    #allocation7 [shape = 'u8[147456]{0}', space=vmem, size = 0x24000, scoped, tag = 'input window, operand 2']
    #allocation8 [shape = 's32[2]{0}', space=sflag, size = 0x8, scoped, tag = 'scoped memory for tpu_custom_call.1']
    #allocation9 [shape = 'u8[8192]{0}', space=vmem, size = 0x2000, scoped, tag = 'output window, operand 0']
    %11 = vsyncpa [#allocation5], 0
    %12 = vsyncpa [#allocation3], 0
    %s13 = scalar_lea.sflag [#allocation3], 1
    %14 = vsyncpa %s13, 0
    %15 = vsyncpa [#allocation8], 0
    %s16 = scalar_lea.sflag [#allocation8], 1
    %17 = vsyncpa %s16, 0
    %18 = vsyncpa [#allocation4], 0
    %s19 = scalar_lea.sflag [#allocation4], 1
    %20 = vsyncpa %s19, 0
    loop: start=0, step=1, limit=4
    $region2: #{tpu_custom_call.1} parent=1 // loop_pre_header
      _
    $region3: #{tpu_custom_call.1} parent=1 // loop_header
      %s22 = sphi 0, %s26
      %p23 = scmp.ge.s32.totalorder %s22, 4
      %s29 = sphi 0, %s41
      %s30 = sphi 0, %s37
      %s31 = sphi 0, %s29
      %s32 = sphi 0, %s30
      %s33 = sphi 0, %s31
      %s34 = sphi 0, %s32
      %s42 = sphi 0, %s42
      %s44 = sphi 0, %s42
      %s45 = sphi 0, %s44
      %s59 = sphi 0, %s45
      %s67 = sphi 0, %s69
      %s70 = sphi 0, %s67
      %s71 = sphi 0, %s70
      %s87 = sphi 0, %s71
      %s95 = sphi 0, %s97
      %s98 = sphi 0, %s95
      %s99 = sphi 0, %s98
      %s115 = sphi 0, %s99
      %s121 = sphi 0, %s123
      %s124 = sphi 0, %s121
      %s125 = sphi 0, %s124
      %s141 = sphi 0, %s125
      %s145 = sphi 0, %s145
      %s147 = sphi 0, %s145
      %s148 = sphi 0, %s147
      %s162 = sphi 0, %s148
      %s166 = sphi 0, %s166
      %s168 = sphi 0, %s166
      %s169 = sphi 0, %s168
      %s183 = sphi 0, %s169
      %s191 = sphi 0, %s193
      %s194 = sphi 0, %s191
      %s195 = sphi 0, %s194
      %s211 = sphi 0, %s195
    $region4: #{tpu_custom_call.1} parent=1 // loop_header_branch
      %25 = sbr.rel (%p23) target = $region8
    $region5: #{tpu_custom_call.1} parent=1 // loop_body
      %s27 = ssub.s32 %s22, 1
      %s28 = ssub.s32 %s22, 2
      %s35 = sadd.s32 1, %s30
      %p36 = scmp.ge.s32.totalorder %s35, 1
      %s37 = scalar_select %p36, 0, %s35
      %s38 = sadd.s32 1, %s29
      %s39 = scalar_select %p36, %s38, %s29
      %p40 = scmp.ge.s32.totalorder %s39, 2
      %s41 = scalar_select %p40, 0, %s39
      %s43 = sadd.s32 %s42, 1
      %p46 = scmp.eq.s32.totalorder %s22, 1
      %p47 = scmp.ne.s32.totalorder %s42, %s44
      %p48 = scmp.eq.s32.totalorder %s22, 0
      %p49 = por %p47, %p48
      %p50 = scmp.ne.s32.totalorder %s42, %s44
      %p51 = scmp.eq.s32.totalorder %s27, 1
      %p52 = por %p50, %p51
      %p53 = scmp.ne.s32.totalorder %s44, %s45
      %p54 = scmp.eq.s32.totalorder %s27, 0
      %p55 = por %p53, %p54
      %p56 = scmp.ne.s32.totalorder %s44, %s45
      %p57 = scmp.eq.s32.totalorder %s28, 1
      %p58 = por %p56, %p57
      %p60 = scmp.ne.s32.totalorder %s45, %s59
      %p61 = scmp.eq.s32.totalorder %s28, 0
      %p62 = por %p60, %p61
      %s63 = ssub.s32 %s29, %s41
      %s64 = ssub.s32 %s30, %s37
      %s65 = sor.u32 %s63, %s64
      %p66 = scmp.eq.s32.totalorder %s65, 0
      %s68 = sadd.s32 %s67, 1
      %s69 = scalar_select %p66, %s67, %s68
      %p72 = pneg %p66
      %p73 = scmp.eq.s32.totalorder %s22, 1
      %p74 = por %p72, %p73
      %p75 = scmp.ne.s32.totalorder %s67, %s70
      %p76 = scmp.eq.s32.totalorder %s22, 0
      %p77 = por %p75, %p76
      %p78 = scmp.ne.s32.totalorder %s67, %s70
      %p79 = scmp.eq.s32.totalorder %s27, 1
      %p80 = por %p78, %p79
      %p81 = scmp.ne.s32.totalorder %s70, %s71
      %p82 = scmp.eq.s32.totalorder %s27, 0
      %p83 = por %p81, %p82
      %p84 = scmp.ne.s32.totalorder %s70, %s71
      %p85 = scmp.eq.s32.totalorder %s28, 1
      %p86 = por %p84, %p85
      %p88 = scmp.ne.s32.totalorder %s71, %s87
      %p89 = scmp.eq.s32.totalorder %s28, 0
      %p90 = por %p88, %p89
      %s91 = ssub.s32 %s29, %s41
      %s92 = ssub.s32 %s30, %s37
      %s93 = sor.u32 %s91, %s92
      %p94 = scmp.eq.s32.totalorder %s93, 0
      %s96 = sadd.s32 %s95, 1
      %s97 = scalar_select %p94, %s95, %s96
      %p100 = pneg %p94
      %p101 = scmp.eq.s32.totalorder %s22, 1
      %p102 = por %p100, %p101
      %p103 = scmp.ne.s32.totalorder %s95, %s98
      %p104 = scmp.eq.s32.totalorder %s22, 0
      %p105 = por %p103, %p104
      %p106 = scmp.ne.s32.totalorder %s95, %s98
      %p107 = scmp.eq.s32.totalorder %s27, 1
      %p108 = por %p106, %p107
      %p109 = scmp.ne.s32.totalorder %s98, %s99
      %p110 = scmp.eq.s32.totalorder %s27, 0
      %p111 = por %p109, %p110
      %p112 = scmp.ne.s32.totalorder %s98, %s99
      %p113 = scmp.eq.s32.totalorder %s28, 1
      %p114 = por %p112, %p113
      %p116 = scmp.ne.s32.totalorder %s99, %s115
      %p117 = scmp.eq.s32.totalorder %s28, 0
      %p118 = por %p116, %p117
      %s119 = ssub.s32 %s29, %s41
      %p120 = scmp.eq.s32.totalorder %s119, 0
      %s122 = sadd.s32 %s121, 1
      %s123 = scalar_select %p120, %s121, %s122
      %p126 = pneg %p120
      %p127 = scmp.eq.s32.totalorder %s22, 1
      %p128 = por %p126, %p127
      %p129 = scmp.ne.s32.totalorder %s121, %s124
      %p130 = scmp.eq.s32.totalorder %s22, 0
      %p131 = por %p129, %p130
      %p132 = scmp.ne.s32.totalorder %s121, %s124
      %p133 = scmp.eq.s32.totalorder %s27, 1
      %p134 = por %p132, %p133
      %p135 = scmp.ne.s32.totalorder %s124, %s125
      %p136 = scmp.eq.s32.totalorder %s27, 0
      %p137 = por %p135, %p136
      %p138 = scmp.ne.s32.totalorder %s124, %s125
      %p139 = scmp.eq.s32.totalorder %s28, 1
      %p140 = por %p138, %p139
      %p142 = scmp.ne.s32.totalorder %s125, %s141
      %p143 = scmp.eq.s32.totalorder %s28, 0
      %p144 = por %p142, %p143
      %s146 = sadd.s32 %s145, 1
      %p149 = scmp.eq.s32.totalorder %s22, 1
      %p150 = scmp.ne.s32.totalorder %s145, %s147
      %p151 = scmp.eq.s32.totalorder %s22, 0
      %p152 = por %p150, %p151
      %p153 = scmp.ne.s32.totalorder %s145, %s147
      %p154 = scmp.eq.s32.totalorder %s27, 1
      %p155 = por %p153, %p154
      %p156 = scmp.ne.s32.totalorder %s147, %s148
      %p157 = scmp.eq.s32.totalorder %s27, 0
      %p158 = por %p156, %p157
      %p159 = scmp.ne.s32.totalorder %s147, %s148
      %p160 = scmp.eq.s32.totalorder %s28, 1
      %p161 = por %p159, %p160
      %p163 = scmp.ne.s32.totalorder %s148, %s162
      %p164 = scmp.eq.s32.totalorder %s28, 0
      %p165 = por %p163, %p164
      %s167 = sadd.s32 %s166, 1
      %p170 = scmp.eq.s32.totalorder %s22, 1
      %p171 = scmp.ne.s32.totalorder %s166, %s168
      %p172 = scmp.eq.s32.totalorder %s22, 0
      %p173 = por %p171, %p172
      %p174 = scmp.ne.s32.totalorder %s166, %s168
      %p175 = scmp.eq.s32.totalorder %s27, 1
      %p176 = por %p174, %p175
      %p177 = scmp.ne.s32.totalorder %s168, %s169
      %p178 = scmp.eq.s32.totalorder %s27, 0
      %p179 = por %p177, %p178
      %p180 = scmp.ne.s32.totalorder %s168, %s169
      %p181 = scmp.eq.s32.totalorder %s28, 1
      %p182 = por %p180, %p181
      %p184 = scmp.ne.s32.totalorder %s169, %s183
      %p185 = scmp.eq.s32.totalorder %s28, 0
      %p186 = por %p184, %p185
      %s187 = ssub.s32 %s29, %s41
      %s188 = ssub.s32 %s30, %s37
      %s189 = sor.u32 %s187, %s188
      %p190 = scmp.eq.s32.totalorder %s189, 0
      %s192 = sadd.s32 %s191, 1
      %s193 = scalar_select %p190, %s191, %s192
      %p196 = pneg %p190
      %p197 = scmp.eq.s32.totalorder %s22, 1
      %p198 = por %p196, %p197
      %p199 = scmp.ne.s32.totalorder %s191, %s194
      %p200 = scmp.eq.s32.totalorder %s22, 0
      %p201 = por %p199, %p200
      %p202 = scmp.ne.s32.totalorder %s191, %s194
      %p203 = scmp.eq.s32.totalorder %s27, 1
      %p204 = por %p202, %p203
      %p205 = scmp.ne.s32.totalorder %s194, %s195
      %p206 = scmp.eq.s32.totalorder %s27, 0
      %p207 = por %p205, %p206
      %p208 = scmp.ne.s32.totalorder %s194, %s195
      %p209 = scmp.eq.s32.totalorder %s28, 1
      %p210 = por %p208, %p209
      %p212 = scmp.ne.s32.totalorder %s195, %s211
      %p213 = scmp.eq.s32.totalorder %s28, 0
      %p214 = por %p212, %p213
      %p215 = scmp.le.s32.totalorder 1, %s22
      %p216 = scmp.lt.s32.totalorder %s22, 3
      %p217 = pnand %p215, %p216
      %p218 = pneg %p217
      // Predicated region
      $region9: #{tpu_custom_call.1} parent=5 // pred_check
        _
      $region10: #{tpu_custom_call.1} parent=5 // pred_check_branch
        %220 = sbr.rel (%p217) target = $region12
      $region11: #{tpu_custom_call.1} parent=5 // pred_region
        %s221 = ssub.s32 %s22, 1
        // Predicated region
        $region13: #{tpu_custom_call.1} parent=11 // pred_check
          %p222 = pneg %p55
        $region14: #{tpu_custom_call.1} parent=11 // pred_check_branch
          %224 = sbr.rel (%p222) target = $region16
        $region15: #{tpu_custom_call.1} parent=11 // pred_region
          %s226 = ssub.s32 64, 64
          %227 = vsyncadd [#allocation5], %s226
          %s229 = sshll.u32 %s0, 4
          %s230 = int_to_ptr.vmem [resolvable:$true] %s229
          %232 = dma.vmem_to_smem %s230, 64, [#allocation2], [#allocation5]
        $region16: #{tpu_custom_call.1} parent=11 // pred_fallthru
          _
        // Predicated region
        $region17: #{tpu_custom_call.1} parent=11 // pred_check
          %p233 = pneg %p158
        $region18: #{tpu_custom_call.1} parent=11 // pred_check_branch
          %235 = sbr.rel (%p233) target = $region20
        $region19: #{tpu_custom_call.1} parent=11 // pred_region
          _
        $region20: #{tpu_custom_call.1} parent=11 // pred_fallthru
          _
        // Predicated region
        $region21: #{tpu_custom_call.1} parent=11 // pred_check
          %p236 = pneg %p179
        $region22: #{tpu_custom_call.1} parent=11 // pred_check_branch
          %238 = sbr.rel (%p236) target = $region24
        $region23: #{tpu_custom_call.1} parent=11 // pred_region
          _
        $region24: #{tpu_custom_call.1} parent=11 // pred_fallthru
          _
      $region12: #{tpu_custom_call.1} parent=5 // pred_fallthru
        _
      %p239 = scmp.lt.s32.totalorder %s22, 2
      // Predicated region
      $region25: #{tpu_custom_call.1} parent=5 // pred_check
        %p240 = pneg %p239
      $region26: #{tpu_custom_call.1} parent=5 // pred_check_branch
        %242 = sbr.rel (%p240) target = $region28
      $region27: #{tpu_custom_call.1} parent=5 // pred_region
        // Predicated region
        $region29: #{tpu_custom_call.1} parent=27 // pred_check
          %p243 = pneg %p77
        $region30: #{tpu_custom_call.1} parent=27 // pred_check_branch
          %245 = sbr.rel (%p243) target = $region32
        $region31: #{tpu_custom_call.1} parent=27 // pred_region
          %s246 = sand.u32 %s67, 1
          %s247 = scalar_lea.sflag [#allocation3], %s246
          %s248 = sand.u32 %s67, 1
          %s249 = smul.addr %s248, 144
          %s250 = scalar_lea.vmem [#allocation6], %s249
          %s251 = smul.u32 2, %s30
          %s253 = ssub.s32 2304, 2304
          %254 = vsyncadd %s247, %s253
          %s255 = smul.addr %s29, 18
          %s256 = sadd.s32 %s251, %s255
          %s257 = smul.addr %s256, 128
          %s258 = scalar_lea.hbm %s1, %s257
          %s259 = sshll.u32 %s250, 4
          %s260 = int_to_ptr.vmem [resolvable:$true] %s259
          %265 = dma.hbm_to_vmem [thread:$0]  %s258, 2304, %s260, %s247, 256, 256, 16
        $region32: #{tpu_custom_call.1} parent=27 // pred_fallthru
          _
        // Predicated region
        $region33: #{tpu_custom_call.1} parent=27 // pred_check
          %p266 = pneg %p105
        $region34: #{tpu_custom_call.1} parent=27 // pred_check_branch
          %268 = sbr.rel (%p266) target = $region36
        $region35: #{tpu_custom_call.1} parent=27 // pred_region
          %s269 = sand.u32 %s95, 1
          %s270 = scalar_lea.sflag [#allocation8], %s269
          %s271 = sand.u32 %s95, 1
          %s272 = smul.addr %s271, 144
          %s273 = scalar_lea.vmem [#allocation7], %s272
          %s274 = smul.u32 2, %s30
          %s276 = ssub.s32 2304, 2304
          %277 = vsyncadd %s270, %s276
          %s278 = smul.addr %s29, 18
          %s279 = sadd.s32 %s274, %s278
          %s280 = smul.addr %s279, 128
          %s281 = scalar_lea.hbm %s2, %s280
          %s282 = sshll.u32 %s273, 4
          %s283 = int_to_ptr.vmem [resolvable:$true] %s282
          %288 = dma.hbm_to_vmem [thread:$0]  %s281, 2304, %s283, %s270, 256, 256, 16
        $region36: #{tpu_custom_call.1} parent=27 // pred_fallthru
          _
        // Predicated region
        $region37: #{tpu_custom_call.1} parent=27 // pred_check
          %p289 = pneg %p131
        $region38: #{tpu_custom_call.1} parent=27 // pred_check_branch
          %291 = sbr.rel (%p289) target = $region40
        $region39: #{tpu_custom_call.1} parent=27 // pred_region
          %p292 = scmp.lt.s32.totalorder %s29, 1
          %s293 = scalar_select %p292, %s29, 1
          %s294 = smul.addr %s293, 9
          %s295 = smul.addr %s294, 8
          %s296 = scalar_lea.vmem %s3, %s295
        $region40: #{tpu_custom_call.1} parent=27 // pred_fallthru
          _
      $region28: #{tpu_custom_call.1} parent=5 // pred_fallthru
        _
      %p297 = scmp.le.s32.totalorder 1, %s22
      %p298 = scmp.lt.s32.totalorder %s22, 3
      %p299 = pnand %p297, %p298
      %p300 = pneg %p299
      // Predicated region
      $region41: #{tpu_custom_call.1} parent=5 // pred_check
        _
      $region42: #{tpu_custom_call.1} parent=5 // pred_check_branch
        %302 = sbr.rel (%p299) target = $region44
      $region43: #{tpu_custom_call.1} parent=5 // pred_region
        %s303 = ssub.s32 %s22, 1
        // Predicated region
        $region45: #{tpu_custom_call.1} parent=43 // pred_check
          %p304 = pneg %p55
        $region46: #{tpu_custom_call.1} parent=43 // pred_check_branch
          %306 = sbr.rel (%p304) target = $region48
        $region47: #{tpu_custom_call.1} parent=43 // pred_region
          %307 = dma.done [#allocation5], 64
        $region48: #{tpu_custom_call.1} parent=43 // pred_fallthru
          _
        %s308 = sand.u32 %s70, 1
        %s309 = scalar_lea.sflag [#allocation3], %s308
        %s310 = sand.u32 %s70, 1
        %s311 = smul.addr %s310, 144
        %s312 = scalar_lea.vmem [#allocation6], %s311
        // Predicated region
        $region49: #{tpu_custom_call.1} parent=43 // pred_check
          %p313 = pneg %p83
        $region50: #{tpu_custom_call.1} parent=43 // pred_check_branch
          %315 = sbr.rel (%p313) target = $region52
        $region51: #{tpu_custom_call.1} parent=43 // pred_region
          %316 = dma.done %s309, 2304
        $region52: #{tpu_custom_call.1} parent=43 // pred_fallthru
          _
        %s317 = sand.u32 %s98, 1
        %s318 = scalar_lea.sflag [#allocation8], %s317
        %s319 = sand.u32 %s98, 1
        %s320 = smul.addr %s319, 144
        %s321 = scalar_lea.vmem [#allocation7], %s320
        // Predicated region
        $region53: #{tpu_custom_call.1} parent=43 // pred_check
          %p322 = pneg %p111
        $region54: #{tpu_custom_call.1} parent=43 // pred_check_branch
          %324 = sbr.rel (%p322) target = $region56
        $region55: #{tpu_custom_call.1} parent=43 // pred_region
          %325 = dma.done %s318, 2304
        $region56: #{tpu_custom_call.1} parent=43 // pred_fallthru
          _
        %326 = sfence
        %p327 = pneg %p55
        %p328 = pneg %p52
        %s329 = sand.u32 %s70, 1
        %s330 = scalar_lea.sflag [#allocation3], %s329
        %s331 = sand.u32 %s70, 1
        %s332 = smul.addr %s331, 144
        %s333 = scalar_lea.vmem [#allocation6], %s332
        %p334 = pneg %p83
        %p335 = pneg %p80
        %s336 = sand.u32 %s98, 1
        %s337 = scalar_lea.sflag [#allocation8], %s336
        %s338 = sand.u32 %s98, 1
        %s339 = smul.addr %s338, 144
        %s340 = scalar_lea.vmem [#allocation7], %s339
        %p341 = pneg %p111
        %p342 = pneg %p108
        %p343 = scmp.lt.s32.totalorder %s31, 1
        %s344 = scalar_select %p343, %s31, 1
        %s345 = smul.addr %s344, 9
        %s346 = smul.addr %s345, 8
        %s347 = scalar_lea.vmem %s3, %s346
        %p348 = pneg %p137
        %p349 = pneg %p134
        %p350 = pneg %p158
        %p351 = pneg %p155
        %p352 = pneg %p179
        %p353 = pneg %p176
        %p354 = pneg %p207
        %p355 = pneg %p204
        %s356 = sand.u32 %s194, 1
        %s357 = scalar_lea.sflag [#allocation4], %s356
        %s358 = sand.u32 %s194, 1
        %s359 = smul.addr %s358, 8
        %s360 = scalar_lea.vmem [#allocation9], %s359
        %s361 = smul.u32 2, %s32
        %s362 = smul.u32 2, %s32
        %p363 = scmp.lt.s32.totalorder %s31, 1
        %s364 = scalar_select %p363, %s31, 1
        %s365 = smul.addr %s364, 9
        %s366 = smul.addr %s365, 8
        %s367 = scalar_lea.vmem %s3, %s366
        %s369 = sld [smem:[#allocation2 + %s31]]
        %s370 = sshra.s32 %s31, 7
        %s371 = sand.u32 %s31, 127
        %s372 = sadd.s32 %s370, 1
        %s373 = smul.u32 %s372, 128
        %s374 = sshra.s32 %s31, 7
        %s375 = sand.u32 %s31, 127
        %s376 = sadd.s32 %s373, %s375
        %s377 = sld [smem:[#allocation2 + %s376]]
        %s378 = sadd.s32 %s370, 2
        %s379 = smul.u32 %s378, 128
        %s380 = sadd.s32 %s379, %s375
        %s381 = sld [smem:[#allocation2 + %s380]]
        %v382 = vld [vmem:[%s4] sm:$0xff]
        %v383 = vld [vmem:[%s4 + $0x8] sm:$0xff]
        %v384 = vld [vmem:[%s4 + $0x10] sm:$0xff]
        %v385 = vld [vmem:[%s4 + $0x18] sm:$0xff]
        %v386 = vld [vmem:[%s4 + $0x20] sm:$0xff]
        %v387 = vld [vmem:[%s4 + $0x28] sm:$0xff]
        %v388 = vld [vmem:[%s4 + $0x30] sm:$0xff]
        %v389 = vld [vmem:[%s4 + $0x38] sm:$0xff]
        %v390 = vld [vmem:[%s4 + $0x40] sm:$0xff]
        %v391 = vld [vmem:[%s5] sm:$0xf]
        %v392 = vld [vmem:[%s5 + $0x4] sm:$0xf]
        %v393 = vld [vmem:[%s5 + $0x8] sm:$0xf]
        %v394 = vld [vmem:[%s5 + $0xc] sm:$0xf]
        %v395 = vld [vmem:[%s5 + $0x10] sm:$0xf]
        %v396 = vld [vmem:[%s5 + $0x14] sm:$0xf]
        %v397 = vld [vmem:[%s5 + $0x18] sm:$0xf]
        %v398 = vld [vmem:[%s5 + $0x1c] sm:$0xf]
        %v399 = vld [vmem:[%s5 + $0x20] sm:$0xf]
        %v400 = vld [vmem:[%s367] sm:$0xff]
        %v401 = vld [vmem:[%s367 + $0x8] sm:$0xff]
        %v402 = vld [vmem:[%s367 + $0x10] sm:$0xff]
        %v403 = vld [vmem:[%s367 + $0x18] sm:$0xff]
        %v404 = vld [vmem:[%s367 + $0x20] sm:$0xff]
        %v405 = vld [vmem:[%s367 + $0x28] sm:$0xff]
        %v406 = vld [vmem:[%s367 + $0x30] sm:$0xff]
        %v407 = vld [vmem:[%s367 + $0x38] sm:$0xff]
        %v408 = vld [vmem:[%s367 + $0x40] sm:$0xff]
        %410 = vset.pattern.permute.xlu0 0
        %411 = vperm.xlu0 %410, %v400
        %v412 = vpop.permute.xlu0 %411
        %415 = vset.pattern.permute.xlu0 0
        %416 = vperm.xlu0 %415, %v401
        %v417 = vpop.permute.xlu0 %416
        %420 = vset.pattern.permute.xlu0 0
        %421 = vperm.xlu0 %420, %v402
        %v422 = vpop.permute.xlu0 %421
        %425 = vset.pattern.permute.xlu0 0
        %426 = vperm.xlu0 %425, %v403
        %v427 = vpop.permute.xlu0 %426
        %430 = vset.pattern.permute.xlu0 0
        %431 = vperm.xlu0 %430, %v404
        %v432 = vpop.permute.xlu0 %431
        %435 = vset.pattern.permute.xlu0 0
        %436 = vperm.xlu0 %435, %v405
        %v437 = vpop.permute.xlu0 %436
        %440 = vset.pattern.permute.xlu0 0
        %441 = vperm.xlu0 %440, %v406
        %v442 = vpop.permute.xlu0 %441
        %445 = vset.pattern.permute.xlu0 0
        %446 = vperm.xlu0 %445, %v407
        %v447 = vpop.permute.xlu0 %446
        %450 = vset.pattern.permute.xlu0 0
        %451 = vperm.xlu0 %450, %v408
        %v452 = vpop.permute.xlu0 %451
        %v454 = vld [vmem:[%s312] sm:$0xff]
        %v455 = vld [vmem:[%s312 + $0x10] sm:$0xff]
        %v456 = vld [vmem:[%s312 + $0x20] sm:$0xff]
        %v457 = vld [vmem:[%s312 + $0x30] sm:$0xff]
        %v458 = vld [vmem:[%s312 + $0x40] sm:$0xff]
        %v459 = vld [vmem:[%s312 + $0x50] sm:$0xff]
        %v460 = vld [vmem:[%s312 + $0x60] sm:$0xff]
        %v461 = vld [vmem:[%s312 + $0x70] sm:$0xff]
        %v462 = vld [vmem:[%s312 + $0x80] sm:$0xff]
        %v463 = vld [vmem:[%s321] sm:$0xff]
        %v464 = vld [vmem:[%s321 + $0x10] sm:$0xff]
        %v465 = vld [vmem:[%s321 + $0x20] sm:$0xff]
        %v466 = vld [vmem:[%s321 + $0x30] sm:$0xff]
        %v467 = vld [vmem:[%s321 + $0x40] sm:$0xff]
        %v468 = vld [vmem:[%s321 + $0x50] sm:$0xff]
        %v469 = vld [vmem:[%s321 + $0x60] sm:$0xff]
        %v470 = vld [vmem:[%s321 + $0x70] sm:$0xff]
        %v471 = vld [vmem:[%s321 + $0x80] sm:$0xff]
        %473 = vset.pattern.permute.xlu0 0
        %474 = vperm.xlu0 %473, %v382
        %v475 = vpop.permute.xlu0 %474
        %478 = vset.pattern.permute.xlu0 0
        %479 = vperm.xlu0 %478, %v383
        %v480 = vpop.permute.xlu0 %479
        %483 = vset.pattern.permute.xlu0 0
        %484 = vperm.xlu0 %483, %v384
        %v485 = vpop.permute.xlu0 %484
        %488 = vset.pattern.permute.xlu0 0
        %489 = vperm.xlu0 %488, %v385
        %v490 = vpop.permute.xlu0 %489
        %493 = vset.pattern.permute.xlu0 0
        %494 = vperm.xlu0 %493, %v386
        %v495 = vpop.permute.xlu0 %494
        %498 = vset.pattern.permute.xlu0 0
        %499 = vperm.xlu0 %498, %v387
        %v500 = vpop.permute.xlu0 %499
        %503 = vset.pattern.permute.xlu0 0
        %504 = vperm.xlu0 %503, %v388
        %v505 = vpop.permute.xlu0 %504
        %508 = vset.pattern.permute.xlu0 0
        %509 = vperm.xlu0 %508, %v389
        %v510 = vpop.permute.xlu0 %509
        %513 = vset.pattern.permute.xlu0 0
        %514 = vperm.xlu0 %513, %v390
        %v515 = vpop.permute.xlu0 %514
        %v517 = vmul.f32 %v454, %v475
        %v518 = vmul.f32 %v455, %v480
        %v519 = vmul.f32 %v456, %v485
        %v520 = vmul.f32 %v457, %v490
        %v521 = vmul.f32 %v458, %v495
        %v522 = vmul.f32 %v459, %v500
        %v523 = vmul.f32 %v460, %v505
        %v524 = vmul.f32 %v461, %v510
        %v525 = vmul.f32 %v462, %v515
        %526 = vset.pattern.permute.xlu0 1
        %527 = vperm.xlu0 %526, %v382
        %v528 = vpop.permute.xlu0 %527
        %530 = vset.pattern.permute.xlu0 1
        %531 = vperm.xlu0 %530, %v383
        %v532 = vpop.permute.xlu0 %531
        %534 = vset.pattern.permute.xlu0 1
        %535 = vperm.xlu0 %534, %v384
        %v536 = vpop.permute.xlu0 %535
        %538 = vset.pattern.permute.xlu0 1
        %539 = vperm.xlu0 %538, %v385
        %v540 = vpop.permute.xlu0 %539
        %542 = vset.pattern.permute.xlu0 1
        %543 = vperm.xlu0 %542, %v386
        %v544 = vpop.permute.xlu0 %543
        %546 = vset.pattern.permute.xlu0 1
        %547 = vperm.xlu0 %546, %v387
        %v548 = vpop.permute.xlu0 %547
        %550 = vset.pattern.permute.xlu0 1
        %551 = vperm.xlu0 %550, %v388
        %v552 = vpop.permute.xlu0 %551
        %554 = vset.pattern.permute.xlu0 1
        %555 = vperm.xlu0 %554, %v389
        %v556 = vpop.permute.xlu0 %555
        %558 = vset.pattern.permute.xlu0 1
        %559 = vperm.xlu0 %558, %v390
        %v560 = vpop.permute.xlu0 %559
        %v562 = vadd.f32 %v517, %v528
        %v563 = vadd.f32 %v518, %v532
        %v564 = vadd.f32 %v519, %v536
        %v565 = vadd.f32 %v520, %v540
        %v566 = vadd.f32 %v521, %v544
        %v567 = vadd.f32 %v522, %v548
        %v568 = vadd.f32 %v523, %v552
        %v569 = vadd.f32 %v524, %v556
        %v570 = vadd.f32 %v525, %v560
        %v571 = vstv %s369
        %v572 = vmul.f32 %v571, %v562
        %v573 = vmul.f32 %v571, %v563
        %v574 = vmul.f32 %v571, %v564
        %v575 = vmul.f32 %v571, %v565
        %v576 = vmul.f32 %v571, %v566
        %v577 = vmul.f32 %v571, %v567
        %v578 = vmul.f32 %v571, %v568
        %v579 = vmul.f32 %v571, %v569
        %v580 = vmul.f32 %v571, %v570
        %v581 = vstv %s377
        %v582 = vmul.f32 %v581, %v463
        %v583 = vmul.f32 %v581, %v464
        %v584 = vmul.f32 %v581, %v465
        %v585 = vmul.f32 %v581, %v466
        %v586 = vmul.f32 %v581, %v467
        %v587 = vmul.f32 %v581, %v468
        %v588 = vmul.f32 %v581, %v469
        %v589 = vmul.f32 %v581, %v470
        %v590 = vmul.f32 %v581, %v471
        %v591 = vadd.f32 %v572, %v582
        %v592 = vadd.f32 %v573, %v583
        %v593 = vadd.f32 %v574, %v584
        %v594 = vadd.f32 %v575, %v585
        %v595 = vadd.f32 %v576, %v586
        %v596 = vadd.f32 %v577, %v587
        %v597 = vadd.f32 %v578, %v588
        %v598 = vadd.f32 %v579, %v589
        %v599 = vadd.f32 %v580, %v590
        %v600 = vpack.c.bf16 %v592, %v591
        %v601 = vpack.c.bf16 %v594, %v593
        %v602 = vpack.c.bf16 %v596, %v595
        %v603 = vpack.c.bf16 %v598, %v597
        %v604 = vpack.c.bf16 %v599, %v599
        %v614 = vunpack.c.l.b16 %v391
        %v615 = vunpack.c.l.b16 %v392
        %v616 = vunpack.c.l.b16 %v393
        %v617 = vunpack.c.l.b16 %v394
        %v618 = vunpack.c.l.b16 %v395
        %v619 = vunpack.c.l.b16 %v396
        %v620 = vunpack.c.l.b16 %v397
        %v621 = vunpack.c.l.b16 %v398
        %v622 = vunpack.c.l.b16 %v399
        %v623 = vpack.c.b16 %v615, %v614
        %v624 = vpack.c.b16 %v617, %v616
        %v625 = vpack.c.b16 %v619, %v618
        %v626 = vpack.c.b16 %v621, %v620
        %v627 = vpack.c.b16 %v622, %v622
        %vm628 = vcmask 588800
        %v630 = vsel %vm628, %v623, 0
        %v633 = vsel %vm628, %v624, 0
        %v636 = vsel %vm628, %v625, 0
        %v639 = vsel %vm628, %v626, 0
        %v642 = vsel %vm628, %v627, 0
        %vm644 = vcmask 1043456
        %v646 = vsel %vm644, %v604, 0
        %648 = vmatprep.subr.bf16.mxu0 0
        %649 = vmatpush1.bf16.msra.mxu0 %v600
        %650 = vmatprep.subr.bf16.mxu0 0
        %651 = vmatpush1.bf16.msra.mxu0 %v601
        %652 = vmatprep.subr.bf16.mxu0 0
        %653 = vmatpush1.bf16.msra.mxu0 %v602
        %654 = vmatprep.subr.bf16.mxu0 0
        %655 = vmatpush1.bf16.msra.mxu0 %v603
        %656 = vmatprep.subr.bf16.mxu0 0
        %657 = vmatpush1.bf16.msra.mxu0 %v646
        %658 = vmatprep.subr.bf16.mxu0 0
        %659 = vmatpush1.bf16.msra.mxu0 0
        %660 = vmatprep.subr.bf16.mxu0 0
        %661 = vmatpush1.bf16.msra.mxu0 0
        %662 = vmatprep.subr.bf16.mxu0 0
        %663 = vmatpush1.bf16.msra.mxu0 0
        %664 = vmatprep.subr.bf16.mxu0 0
        %665 = vmatpush1.bf16.msra.mxu0 0
        %666 = vmatprep.subr.bf16.mxu0 0
        %667 = vmatpush1.bf16.msra.mxu0 0
        %668 = vmatprep.subr.bf16.mxu0 0
        %669 = vmatpush1.bf16.msra.mxu0 0
        %670 = vmatprep.subr.bf16.mxu0 0
        %671 = vmatpush1.bf16.msra.mxu0 0
        %672 = vmatprep.subr.bf16.mxu0 0
        %673 = vmatpush1.bf16.msra.mxu0 0
        %674 = vmatprep.subr.bf16.mxu0 0
        %675 = vmatpush1.bf16.msra.mxu0 0
        %676 = vmatprep.subr.bf16.mxu0 0
        %677 = vmatpush1.bf16.msra.mxu0 0
        %678 = vmatprep.subr.bf16.mxu0 0
        %679 = vmatpush1.bf16.msra.mxu0 0
        %680 = vmatprep.mubr.bf16.mxu0 0
        %681 = vmatmul.mubr.bf16.gmra.mrb[0].mxu0 %v630
        %v682 = vpop.f32.mrb[0].mxu0
        %v683 = vadd.f32 %v412, %v682
        %v684 = vpop.f32.mrb[0].mxu0
        %v685 = vpop.f32.mrb[0].mxu0
        %v686 = vadd.f32 %v417, %v685
        %v687 = vpop.f32.mrb[0].mxu0
        %688 = vmatprep.mubr.bf16.mxu0 0
        %689 = vmatmul.mubr.bf16.gmra.mrb[0].mxu0 %v633
        %v690 = vpop.f32.mrb[0].mxu0
        %v691 = vadd.f32 %v422, %v690
        %v692 = vpop.f32.mrb[0].mxu0
        %v693 = vpop.f32.mrb[0].mxu0
        %v694 = vadd.f32 %v427, %v693
        %v695 = vpop.f32.mrb[0].mxu0
        %696 = vmatprep.mubr.bf16.mxu0 0
        %697 = vmatmul.mubr.bf16.gmra.mrb[0].mxu0 %v636
        %v698 = vpop.f32.mrb[0].mxu0
        %v699 = vadd.f32 %v432, %v698
        %v700 = vpop.f32.mrb[0].mxu0
        %v701 = vpop.f32.mrb[0].mxu0
        %v702 = vadd.f32 %v437, %v701
        %v703 = vpop.f32.mrb[0].mxu0
        %704 = vmatprep.mubr.bf16.mxu0 0
        %705 = vmatmul.mubr.bf16.gmra.mrb[0].mxu0 %v639
        %v706 = vpop.f32.mrb[0].mxu0
        %v707 = vadd.f32 %v442, %v706
        %v708 = vpop.f32.mrb[0].mxu0
        %v709 = vpop.f32.mrb[0].mxu0
        %v710 = vadd.f32 %v447, %v709
        %v711 = vpop.f32.mrb[0].mxu0
        %712 = vmatprep.mubr.bf16.mxu0 0
        %713 = vmatmul.mubr.bf16.gmra.mrb[0].mxu0 %v642
        %v714 = vpop.f32.mrb[0].mxu0
        %v715 = vadd.f32 %v452, %v714
        %v716 = vpop.f32.mrb[0].mxu0
        %v717 = vpop.f32.mrb[0].mxu0
        %v718 = vpop.f32.mrb[0].mxu0
        %719 = vdwg.mxu0
        %v720 = vmul.f32 %v571, %v463
        %v721 = vmul.f32 %v571, %v464
        %v722 = vmul.f32 %v571, %v465
        %v723 = vmul.f32 %v571, %v466
        %v724 = vmul.f32 %v571, %v467
        %v725 = vmul.f32 %v571, %v468
        %v726 = vmul.f32 %v571, %v469
        %v727 = vmul.f32 %v571, %v470
        %v728 = vmul.f32 %v571, %v471
        %v729 = vmul.f32 %v581, %v562
        %v730 = vmul.f32 %v581, %v563
        %v731 = vmul.f32 %v581, %v564
        %v732 = vmul.f32 %v581, %v565
        %v733 = vmul.f32 %v581, %v566
        %v734 = vmul.f32 %v581, %v567
        %v735 = vmul.f32 %v581, %v568
        %v736 = vmul.f32 %v581, %v569
        %v737 = vmul.f32 %v581, %v570
        %v738 = vsub.f32 %v720, %v729
        %v739 = vsub.f32 %v721, %v730
        %v740 = vsub.f32 %v722, %v731
        %v741 = vsub.f32 %v723, %v732
        %v742 = vsub.f32 %v724, %v733
        %v743 = vsub.f32 %v725, %v734
        %v744 = vsub.f32 %v726, %v735
        %v745 = vsub.f32 %v727, %v736
        %v746 = vsub.f32 %v728, %v737
        %v747 = vsub.f32 %v683, %v738
        %v748 = vsub.f32 %v686, %v739
        %v749 = vsub.f32 %v691, %v740
        %v750 = vsub.f32 %v694, %v741
        %v751 = vsub.f32 %v699, %v742
        %v752 = vsub.f32 %v702, %v743
        %v753 = vsub.f32 %v707, %v744
        %v754 = vsub.f32 %v710, %v745
        %v755 = vsub.f32 %v715, %v746
        %v756 = vand.u32 2147483647, %v747
        %v757 = vand.u32 2147483647, %v748
        %v758 = vand.u32 2147483647, %v749
        %v759 = vand.u32 2147483647, %v750
        %v760 = vand.u32 2147483647, %v751
        %v761 = vand.u32 2147483647, %v752
        %v762 = vand.u32 2147483647, %v753
        %v763 = vand.u32 2147483647, %v754
        %v764 = vand.u32 2147483647, %v755
        %v765 = vstv %s381
        %v766 = vmul.f32 %v756, %v765
        %v767 = vmul.f32 %v757, %v765
        %v768 = vmul.f32 %v758, %v765
        %v769 = vmul.f32 %v759, %v765
        %v770 = vmul.f32 %v760, %v765
        %v771 = vmul.f32 %v761, %v765
        %v772 = vmul.f32 %v762, %v765
        %v773 = vmul.f32 %v763, %v765
        %v774 = vmul.f32 %v764, %v765
        %v775 = vadd.f32 %v766, %v767
        %v776 = vadd.f32 %v775, %v768
        %v777 = vadd.f32 %v776, %v769
        %v778 = vadd.f32 %v777, %v770
        %v779 = vadd.f32 %v778, %v771
        %v780 = vadd.f32 %v779, %v772
        %v781 = vadd.f32 %v780, %v773
        %v782 = vadd.f32 %v781, %v774
        %v783 = vadd.f32 %v782, 0.0
        %v784 = vld [vmem:[%s312 + $0x8] sm:$0xff]
        %v785 = vld [vmem:[%s312 + $0x18] sm:$0xff]
        %v786 = vld [vmem:[%s312 + $0x28] sm:$0xff]
        %v787 = vld [vmem:[%s312 + $0x38] sm:$0xff]
        %v788 = vld [vmem:[%s312 + $0x48] sm:$0xff]
        %v789 = vld [vmem:[%s312 + $0x58] sm:$0xff]
        %v790 = vld [vmem:[%s312 + $0x68] sm:$0xff]
        %v791 = vld [vmem:[%s312 + $0x78] sm:$0xff]
        %v792 = vld [vmem:[%s312 + $0x88] sm:$0xff]
        %v793 = vld [vmem:[%s321 + $0x8] sm:$0xff]
        %v794 = vld [vmem:[%s321 + $0x18] sm:$0xff]
        %v795 = vld [vmem:[%s321 + $0x28] sm:$0xff]
        %v796 = vld [vmem:[%s321 + $0x38] sm:$0xff]
        %v797 = vld [vmem:[%s321 + $0x48] sm:$0xff]
        %v798 = vld [vmem:[%s321 + $0x58] sm:$0xff]
        %v799 = vld [vmem:[%s321 + $0x68] sm:$0xff]
        %v800 = vld [vmem:[%s321 + $0x78] sm:$0xff]
        %v801 = vld [vmem:[%s321 + $0x88] sm:$0xff]
        %v802 = vmul.f32 %v784, %v475
        %v803 = vmul.f32 %v785, %v480
        %v804 = vmul.f32 %v786, %v485
        %v805 = vmul.f32 %v787, %v490
        %v806 = vmul.f32 %v788, %v495
        %v807 = vmul.f32 %v789, %v500
        %v808 = vmul.f32 %v790, %v505
        %v809 = vmul.f32 %v791, %v510
        %v810 = vmul.f32 %v792, %v515
        %v811 = vadd.f32 %v802, %v528
        %v812 = vadd.f32 %v803, %v532
        %v813 = vadd.f32 %v804, %v536
        %v814 = vadd.f32 %v805, %v540
        %v815 = vadd.f32 %v806, %v544
        %v816 = vadd.f32 %v807, %v548
        %v817 = vadd.f32 %v808, %v552
        %v818 = vadd.f32 %v809, %v556
        %v819 = vadd.f32 %v810, %v560
        %v820 = vmul.f32 %v571, %v811
        %v821 = vmul.f32 %v571, %v812
        %v822 = vmul.f32 %v571, %v813
        %v823 = vmul.f32 %v571, %v814
        %v824 = vmul.f32 %v571, %v815
        %v825 = vmul.f32 %v571, %v816
        %v826 = vmul.f32 %v571, %v817
        %v827 = vmul.f32 %v571, %v818
        %v828 = vmul.f32 %v571, %v819
        %v829 = vmul.f32 %v581, %v793
        %v830 = vmul.f32 %v581, %v794
        %v831 = vmul.f32 %v581, %v795
        %v832 = vmul.f32 %v581, %v796
        %v833 = vmul.f32 %v581, %v797
        %v834 = vmul.f32 %v581, %v798
        %v835 = vmul.f32 %v581, %v799
        %v836 = vmul.f32 %v581, %v800
        %v837 = vmul.f32 %v581, %v801
        %v838 = vadd.f32 %v820, %v829
        %v839 = vadd.f32 %v821, %v830
        %v840 = vadd.f32 %v822, %v831
        %v841 = vadd.f32 %v823, %v832
        %v842 = vadd.f32 %v824, %v833
        %v843 = vadd.f32 %v825, %v834
        %v844 = vadd.f32 %v826, %v835
        %v845 = vadd.f32 %v827, %v836
        %v846 = vadd.f32 %v828, %v837
        %v847 = vpack.c.bf16 %v839, %v838
        %v848 = vpack.c.bf16 %v841, %v840
        %v849 = vpack.c.bf16 %v843, %v842
        %v850 = vpack.c.bf16 %v845, %v844
        %v851 = vpack.c.bf16 %v846, %v846
        %v853 = vsel %vm644, %v851, 0
        %855 = vmatprep.subr.bf16.mxu0 0
        %856 = vmatpush1.bf16.msra.mxu0 %v847
        %857 = vmatprep.subr.bf16.mxu0 0
        %858 = vmatpush1.bf16.msra.mxu0 %v848
        %859 = vmatprep.subr.bf16.mxu0 0
        %860 = vmatpush1.bf16.msra.mxu0 %v849
        %861 = vmatprep.subr.bf16.mxu0 0
        %862 = vmatpush1.bf16.msra.mxu0 %v850
        %863 = vmatprep.subr.bf16.mxu0 0
        %864 = vmatpush1.bf16.msra.mxu0 %v853
        %865 = vmatprep.subr.bf16.mxu0 0
        %866 = vmatpush1.bf16.msra.mxu0 0
        %867 = vmatprep.subr.bf16.mxu0 0
        %868 = vmatpush1.bf16.msra.mxu0 0
        %869 = vmatprep.subr.bf16.mxu0 0
        %870 = vmatpush1.bf16.msra.mxu0 0
        %871 = vmatprep.subr.bf16.mxu0 0
        %872 = vmatpush1.bf16.msra.mxu0 0
        %873 = vmatprep.subr.bf16.mxu0 0
        %874 = vmatpush1.bf16.msra.mxu0 0
        %875 = vmatprep.subr.bf16.mxu0 0
        %876 = vmatpush1.bf16.msra.mxu0 0
        %877 = vmatprep.subr.bf16.mxu0 0
        %878 = vmatpush1.bf16.msra.mxu0 0
        %879 = vmatprep.subr.bf16.mxu0 0
        %880 = vmatpush1.bf16.msra.mxu0 0
        %881 = vmatprep.subr.bf16.mxu0 0
        %882 = vmatpush1.bf16.msra.mxu0 0
        %883 = vmatprep.subr.bf16.mxu0 0
        %884 = vmatpush1.bf16.msra.mxu0 0
        %885 = vmatprep.subr.bf16.mxu0 0
        %886 = vmatpush1.bf16.msra.mxu0 0
        %887 = vmatprep.mubr.bf16.mxu0 0
        %888 = vmatmul.mubr.bf16.gmra.mrb[0].mxu0 %v630
        %v889 = vpop.f32.mrb[0].mxu0
        %v890 = vadd.f32 %v412, %v889
        %v891 = vpop.f32.mrb[0].mxu0
        %v892 = vpop.f32.mrb[0].mxu0
        %v893 = vadd.f32 %v417, %v892
        %v894 = vpop.f32.mrb[0].mxu0
        %895 = vmatprep.mubr.bf16.mxu0 0
        %896 = vmatmul.mubr.bf16.gmra.mrb[0].mxu0 %v633
        %v897 = vpop.f32.mrb[0].mxu0
        %v898 = vadd.f32 %v422, %v897
        %v899 = vpop.f32.mrb[0].mxu0
        %v900 = vpop.f32.mrb[0].mxu0
        %v901 = vadd.f32 %v427, %v900
        %v902 = vpop.f32.mrb[0].mxu0
        %903 = vmatprep.mubr.bf16.mxu0 0
        %904 = vmatmul.mubr.bf16.gmra.mrb[0].mxu0 %v636
        %v905 = vpop.f32.mrb[0].mxu0
        %v906 = vadd.f32 %v432, %v905
        %v907 = vpop.f32.mrb[0].mxu0
        %v908 = vpop.f32.mrb[0].mxu0
        %v909 = vadd.f32 %v437, %v908
        %v910 = vpop.f32.mrb[0].mxu0
        %911 = vmatprep.mubr.bf16.mxu0 0
        %912 = vmatmul.mubr.bf16.gmra.mrb[0].mxu0 %v639
        %v913 = vpop.f32.mrb[0].mxu0
        %v914 = vadd.f32 %v442, %v913
        %v915 = vpop.f32.mrb[0].mxu0
        %v916 = vpop.f32.mrb[0].mxu0
        %v917 = vadd.f32 %v447, %v916
        %v918 = vpop.f32.mrb[0].mxu0
        %919 = vmatprep.mubr.bf16.mxu0 0
        %920 = vmatmul.mubr.bf16.gmra.mrb[0].mxu0 %v642
        %v921 = vpop.f32.mrb[0].mxu0
        %v922 = vadd.f32 %v452, %v921
        %v923 = vpop.f32.mrb[0].mxu0
        %v924 = vpop.f32.mrb[0].mxu0
        %v925 = vpop.f32.mrb[0].mxu0
        %926 = vdwg.mxu0
        %v927 = vmul.f32 %v571, %v793
        %v928 = vmul.f32 %v571, %v794
        %v929 = vmul.f32 %v571, %v795
        %v930 = vmul.f32 %v571, %v796
        %v931 = vmul.f32 %v571, %v797
        %v932 = vmul.f32 %v571, %v798
        %v933 = vmul.f32 %v571, %v799
        %v934 = vmul.f32 %v571, %v800
        %v935 = vmul.f32 %v571, %v801
        %v936 = vmul.f32 %v581, %v811
        %v937 = vmul.f32 %v581, %v812
        %v938 = vmul.f32 %v581, %v813
        %v939 = vmul.f32 %v581, %v814
        %v940 = vmul.f32 %v581, %v815
        %v941 = vmul.f32 %v581, %v816
        %v942 = vmul.f32 %v581, %v817
        %v943 = vmul.f32 %v581, %v818
        %v944 = vmul.f32 %v581, %v819
        %v945 = vsub.f32 %v927, %v936
        %v946 = vsub.f32 %v928, %v937
        %v947 = vsub.f32 %v929, %v938
        %v948 = vsub.f32 %v930, %v939
        %v949 = vsub.f32 %v931, %v940
        %v950 = vsub.f32 %v932, %v941
        %v951 = vsub.f32 %v933, %v942
        %v952 = vsub.f32 %v934, %v943
        %v953 = vsub.f32 %v935, %v944
        %v954 = vsub.f32 %v890, %v945
        %v955 = vsub.f32 %v893, %v946
        %v956 = vsub.f32 %v898, %v947
        %v957 = vsub.f32 %v901, %v948
        %v958 = vsub.f32 %v906, %v949
        %v959 = vsub.f32 %v909, %v950
        %v960 = vsub.f32 %v914, %v951
        %v961 = vsub.f32 %v917, %v952
        %v962 = vsub.f32 %v922, %v953
        %v963 = vand.u32 2147483647, %v954
        %v964 = vand.u32 2147483647, %v955
        %v965 = vand.u32 2147483647, %v956
        %v966 = vand.u32 2147483647, %v957
        %v967 = vand.u32 2147483647, %v958
        %v968 = vand.u32 2147483647, %v959
        %v969 = vand.u32 2147483647, %v960
        %v970 = vand.u32 2147483647, %v961
        %v971 = vand.u32 2147483647, %v962
        %v972 = vmul.f32 %v963, %v765
        %v973 = vmul.f32 %v964, %v765
        %v974 = vmul.f32 %v965, %v765
        %v975 = vmul.f32 %v966, %v765
        %v976 = vmul.f32 %v967, %v765
        %v977 = vmul.f32 %v968, %v765
        %v978 = vmul.f32 %v969, %v765
        %v979 = vmul.f32 %v970, %v765
        %v980 = vmul.f32 %v971, %v765
        %v981 = vadd.f32 %v972, %v973
        %v982 = vadd.f32 %v981, %v974
        %v983 = vadd.f32 %v982, %v975
        %v984 = vadd.f32 %v983, %v976
        %v985 = vadd.f32 %v984, %v977
        %v986 = vadd.f32 %v985, %v978
        %v987 = vadd.f32 %v986, %v979
        %v988 = vadd.f32 %v987, %v980
        %v989 = vadd.f32 %v783, %v988
        %990 = vst [vmem:[%s360] sm:$0xff] %v989
        %s991 = sand.u32 %s194, 1
        %s992 = scalar_lea.sflag [#allocation4], %s991
        %s993 = sand.u32 %s194, 1
        %s994 = smul.addr %s993, 8
        %s995 = scalar_lea.vmem [#allocation9], %s994
        // Predicated region
        $region57: #{tpu_custom_call.1} parent=43 // pred_check
          %p996 = pneg %p204
        $region58: #{tpu_custom_call.1} parent=43 // pred_check_branch
          %998 = sbr.rel (%p996) target = $region60
        $region59: #{tpu_custom_call.1} parent=43 // pred_region
          %s1000 = ssub.s32 128, 128
          %1001 = vsyncadd %s992, %s1000
          %s1002 = sadd.s32 %s32, %s31
          %s1003 = smul.addr %s1002, 128
          %s1004 = scalar_lea.hbm %s6, %s1003
          %s1006 = sshll.u32 %s995, 4
          %s1007 = int_to_ptr.vmem [resolvable:$true] %s1006
          %1009 = dma.vmem_to_hbm [thread:$0]  %s1007, 128, %s1004, %s992
        $region60: #{tpu_custom_call.1} parent=43 // pred_fallthru
          _
      $region44: #{tpu_custom_call.1} parent=5 // pred_fallthru
        _
      %p1010 = scmp.le.s32.totalorder 2, %s22
      // Predicated region
      $region61: #{tpu_custom_call.1} parent=5 // pred_check
        %p1011 = pneg %p1010
      $region62: #{tpu_custom_call.1} parent=5 // pred_check_branch
        %1013 = sbr.rel (%p1011) target = $region64
      $region63: #{tpu_custom_call.1} parent=5 // pred_region
        %s1014 = ssub.s32 %s22, 2
        // Predicated region
        $region65: #{tpu_custom_call.1} parent=63 // pred_check
          %p1015 = pneg %p210
        $region66: #{tpu_custom_call.1} parent=63 // pred_check_branch
          %1017 = sbr.rel (%p1015) target = $region68
        $region67: #{tpu_custom_call.1} parent=63 // pred_region
          %s1018 = sand.u32 %s195, 1
          %s1019 = scalar_lea.sflag [#allocation4], %s1018
          %s1020 = sand.u32 %s195, 1
          %s1021 = smul.addr %s1020, 8
          %s1022 = scalar_lea.vmem [#allocation9], %s1021
          %1023 = dma.done %s1019, 128
        $region68: #{tpu_custom_call.1} parent=63 // pred_fallthru
          _
      $region64: #{tpu_custom_call.1} parent=5 // pred_fallthru
        _
    $region6: #{tpu_custom_call.1} parent=1 // loop_footer
      %s26 = sadd.s32 1, %s22
    $region7: #{tpu_custom_call.1} parent=1 // loop_footer_branch
      %21 = sbr.rel target = $region3
    $region8: #{tpu_custom_call.1} parent=1 // loop_exit
      _
    %1024 = vsyncpa [#allocation3], 1
    %s1025 = scalar_lea.sflag [#allocation3], 1
    %1026 = vsyncpa %s1025, 1
    %1027 = vsyncpa [#allocation8], 1
    %s1028 = scalar_lea.sflag [#allocation8], 1
    %1029 = vsyncpa %s1028, 1
    %1030 = vsyncpa [#allocation4], 1
    %s1031 = scalar_lea.sflag [#allocation4], 1
    %1032 = vsyncpa %s1031, 1
    %1033 = vsyncpa [#allocation5], 1
    %s1034 = scalar_lea.sflag [#allocation5], 1
    %1035 = vsyncpa %s1034, 1

</llo_original>
